<compile_context>
chip_gen: v7x
topology: tpu7x:2x2x1
jax: 0.10.0
libtpu: 0.0.40
codegen_flags: <defaults>
</compile_context>

<pallas_src>
import math

import jax
import jax.numpy as jnp
from jax.experimental import pallas as pl
from jax.experimental.pallas import tpu as pltpu

EPS = 1e-5


def layernorm3_kernel(x_ref, w_ref, b_ref, o_ref):
    # x_ref / o_ref: (3, TILE)  (normalized axis on sublanes, rows on lanes)
    # w_ref / b_ref: (3, 1) f32 (broadcast along lanes in-kernel)
    x = x_ref[...].astype(jnp.float32)                          # (3, T)

    # Reductions over the 3-row axis go to the XLU sublane reduce (idle slot),
    # all remaining arithmetic operates on the full (3, T) block (dense VALU).
    mean = jnp.sum(x, axis=0, keepdims=True) * (1.0 / 3.0)      # (1, T)
    c = x - mean                                                # (3, T)
    var = jnp.sum(c * c, axis=0, keepdims=True) * (1.0 / 3.0)   # (1, T)
    inv = jax.lax.rsqrt(var + EPS)                              # EUP slot, (1, T)

    w = w_ref[...].astype(jnp.float32)                          # (3, 1)
    b = b_ref[...].astype(jnp.float32)                          # (3, 1)
    o_ref[...] = (c * (inv * w) + b).astype(o_ref.dtype)


def layernorm3_cols(xt, weight, bias, *, tile_r=32768):
    """LayerNorm over axis 0 of an already lane-dense (3, rows) array.

    Zero wrapper-side XLA ops besides the pallas_call itself (weight/bias
    reshapes are free).  Use this directly when the surrounding model can keep
    the (3, rows) layout end-to-end.
    """
    d, rows = xt.shape
    assert d == 3, "kernel is specialized for LayerNorm([3])"

    if rows <= tile_r:
        tile = rows                       # single block, full extent
        nblk = 1
    else:
        nblk = pl.cdiv(rows, tile_r)
        nblk += nblk % 2                  # even block count -> v7x megacore uses both TCs
        tile = ((pl.cdiv(rows, nblk) + 127) // 128) * 128   # lane-dense, mult of 128
        nblk = pl.cdiv(rows, tile)        # ragged last block is clipped by Pallas

    w = weight.astype(jnp.float32).reshape(d, 1)   # free reshape, no jnp.stack
    b = bias.astype(jnp.float32).reshape(d, 1)

    return pl.pallas_call(
        layernorm3_kernel,
        out_shape=jax.ShapeDtypeStruct((d, rows), xt.dtype),
        grid=(nblk,),
        in_specs=[
            pl.BlockSpec((d, tile), lambda i: (0, i)),
            pl.BlockSpec((d, 1), lambda i: (0, 0)),
            pl.BlockSpec((d, 1), lambda i: (0, 0)),
        ],
        out_specs=pl.BlockSpec((d, tile), lambda i: (0, i)),
        compiler_params=pltpu.CompilerParams(
            dimension_semantics=("parallel",)
        ),
    )(xt, w, b)


def layernorm_lastdim(x, weight, bias, *, tile_r=32768):
    """LayerNorm over the last dim (size 3), matching torch.nn.LayerNorm([3]).

    Convenience wrapper for (..., 3) inputs.  The two transposes below are the
    only remaining non-free XLA ops; run under jax.jit for a single dispatch,
    or call layernorm3_cols() directly to avoid them entirely.
    """
    orig_shape = x.shape
    d = orig_shape[-1]
    assert d == 3, "kernel is specialized for LayerNorm([3])"
    rows = math.prod(orig_shape[:-1])

    xt = x.reshape(rows, d).T                     # reshape is free; .T is 1 op
    out_t = layernorm3_cols(xt, weight, bias, tile_r=tile_r)
    return out_t.T.reshape(orig_shape)            # .T is 1 op; reshape free


if __name__ == "__main__":
    key = jax.random.PRNGKey(0)
    # Shape implied by the module's annotate_args: [2, 5, 2, 2, 3] float32
    x = jax.random.normal(key, (2, 5, 2, 2, 3), dtype=jnp.float32)

    # Deterministic parameters from the module's __init__
    weight = jnp.array([2.0, 3.0, 2.0], dtype=jnp.float32)
    bias = jnp.array([0.2, 0.4, 0.3], dtype=jnp.float32)

    def ref_ln(v):
        m = jnp.mean(v, axis=-1, keepdims=True)
        var = jnp.mean((v - m) ** 2, axis=-1, keepdims=True)
        return (v - m) / jnp.sqrt(var + EPS) * weight + bias

    # Spec-shape run (single block, single dispatch under jit).
    fn = jax.jit(layernorm_lastdim)
    y = jax.block_until_ready(fn(x, weight, bias))
    assert y.shape == (2, 5, 2, 2, 3)
    assert jnp.allclose(y, ref_ln(x), atol=1e-5, rtol=1e-5)

    # Small extra check of the tiled (multi-block, even-grid) path.
    x2 = jax.random.normal(jax.random.PRNGKey(1), (512, 3), dtype=jnp.float32)
    y2 = jax.block_until_ready(layernorm_lastdim(x2, weight, bias, tile_r=128))
    assert jnp.allclose(y2, ref_ln(x2), atol=1e-5, rtol=1e-5)

    print("KERNEL_OK")
</pallas_src>

<mosaic_0001>
module attributes {stable_mosaic.version = 11 : i64} {
  func.func @layernorm3_kernel(%arg0: i32, %arg1: memref<3x40xf32, #tpu.memory_space<vmem>>, %arg2: memref<3x1xf32, #tpu.memory_space<vmem>>, %arg3: memref<3x1xf32, #tpu.memory_space<vmem>>, %arg4: memref<3x40xf32, #tpu.memory_space<vmem>>) attributes {dimension_semantics = [#tpu.dimension_semantics<parallel>], iteration_bounds = array<i64: 1>, scalar_prefetch = 0 : i64, scratch_operands = 0 : i64, tpu.core_type = #tpu.core_type<tc>, window_params = [{transform_indices = @transform_0, window_bounds = array<i64: 3, 40>}, {pipeline_mode = #tpu.pipeline_mode<synchronous>, transform_indices = @transform_1, window_bounds = array<i64: 3, 1>}, {pipeline_mode = #tpu.pipeline_mode<synchronous>, transform_indices = @transform_2, window_bounds = array<i64: 3, 1>}, {transform_indices = @transform_3, window_bounds = array<i64: 3, 40>}]} {
    %c0 = arith.constant 0 : index
    %c0_0 = arith.constant 0 : index
    %0 = vector.load %arg1[%c0, %c0_0] : memref<3x40xf32, #tpu.memory_space<vmem>>, vector<3x40xf32>
    %cst = arith.constant dense<0.000000e+00> : vector<40xf32>
    %1 = vector.multi_reduction <add>, %0, %cst [0] : vector<3x40xf32> to vector<40xf32>
    %2 = vector.shape_cast %1 : vector<40xf32> to vector<1x40xf32>
    %cst_1 = arith.constant 0.333333343 : f32
    %3 = vector.broadcast %cst_1 : f32 to vector<1x40xf32>
    %4 = arith.mulf %2, %3 : vector<1x40xf32>
    %5 = vector.broadcast %4 : vector<1x40xf32> to vector<3x40xf32>
    %6 = arith.subf %0, %5 : vector<3x40xf32>
    %7 = arith.mulf %6, %6 : vector<3x40xf32>
    %cst_2 = arith.constant dense<0.000000e+00> : vector<40xf32>
    %8 = vector.multi_reduction <add>, %7, %cst_2 [0] : vector<3x40xf32> to vector<40xf32>
    %9 = vector.shape_cast %8 : vector<40xf32> to vector<1x40xf32>
    %cst_3 = arith.constant 0.333333343 : f32
    %10 = vector.broadcast %cst_3 : f32 to vector<1x40xf32>
    %11 = arith.mulf %9, %10 : vector<1x40xf32>
    %cst_4 = arith.constant 9.99999974E-6 : f32
    %12 = vector.broadcast %cst_4 : f32 to vector<1x40xf32>
    %13 = arith.addf %11, %12 : vector<1x40xf32>
    %14 = math.rsqrt %13 : vector<1x40xf32>
    %c0_5 = arith.constant 0 : index
    %c0_6 = arith.constant 0 : index
    %15 = vector.load %arg2[%c0_5, %c0_6] : memref<3x1xf32, #tpu.memory_space<vmem>>, vector<3x1xf32>
    %c0_7 = arith.constant 0 : index
    %c0_8 = arith.constant 0 : index
    %16 = vector.load %arg3[%c0_7, %c0_8] : memref<3x1xf32, #tpu.memory_space<vmem>>, vector<3x1xf32>
    %17 = vector.broadcast %14 : vector<1x40xf32> to vector<3x40xf32>
    %18 = vector.broadcast %15 : vector<3x1xf32> to vector<3x40xf32>
    %19 = arith.mulf %17, %18 : vector<3x40xf32>
    %20 = arith.mulf %6, %19 : vector<3x40xf32>
    %21 = vector.broadcast %16 : vector<3x1xf32> to vector<3x40xf32>
    %22 = arith.addf %20, %21 : vector<3x40xf32>
    %c0_9 = arith.constant 0 : index
    %c0_10 = arith.constant 0 : index
    %23 = vector.load %arg4[%c0_9, %c0_10] : memref<3x40xf32, #tpu.memory_space<vmem>>, vector<3x40xf32>
    tpu.vector_store %arg4[%c0_9, %c0_10], %22 {strides = array<i32>} : memref<3x40xf32, #tpu.memory_space<vmem>>, vector<3x40xf32>,
    return
  }
  func.func @transform_0(%arg0: i32) -> (i32, i32) {
    %c0_i32 = arith.constant 0 : i32
    %c0_i32_0 = arith.constant 0 : i32
    return %c0_i32, %arg0 : i32, i32
  }
  func.func @transform_1(%arg0: i32) -> (i32, i32) {
    %c0_i32 = arith.constant 0 : i32
    %c0_i32_0 = arith.constant 0 : i32
    %c0_i32_1 = arith.constant 0 : i32
    return %c0_i32, %c0_i32_0 : i32, i32
  }
  func.func @transform_2(%arg0: i32) -> (i32, i32) {
    %c0_i32 = arith.constant 0 : i32
    %c0_i32_0 = arith.constant 0 : i32
    %c0_i32_1 = arith.constant 0 : i32
    return %c0_i32, %c0_i32_0 : i32, i32
  }
  func.func @transform_3(%arg0: i32) -> (i32, i32) {
    %c0_i32 = arith.constant 0 : i32
    %c0_i32_0 = arith.constant 0 : i32
    return %c0_i32, %arg0 : i32, i32
  }
}

</mosaic_0001>

<llo_original>
// kernel: layernorm_lastdim.1
$region0: #{layernorm_lastdim.1}
  #allocation0 [shape = 'u32[]', space=smem, size = 0x4, offset = 0x4, fixed_abs, tag = 'smem constant byte address 0x4 - core index']
  #allocation1 [shape = 'u32[144,128]{1,0:T(1,128)}', space=vmem, size = 0x12000, scoped, tag = 'internal scratch']
  %s0 = inlined_call_operand.vmem [shape: f32[3,40], index: 0, kind: input, shape index: {}]
  %s1 = inlined_call_operand.vmem [shape: f32[3,1], index: 1, kind: input, shape index: {}]
  %s2 = inlined_call_operand.vmem [shape: f32[3,1], index: 2, kind: input, shape index: {}]
  %s3 = inlined_call_operand.vmem [shape: f32[3,40], index: 3, kind: output, shape index: {}]
  %s4 = sld [smem:[#allocation0]]
  $region22: #{layernorm_lastdim.1} parent=0
    _
  %s6 = ssub.s32 1, %s4
  %s7 = scalar_select 0, %s6, %s4
  // Predicated region
  $region2: #{layernorm_lastdim.1} parent=0 // pred_check
    _
  $region3: #{layernorm_lastdim.1} parent=0 // pred_check_branch
    %9 = sbr.rel (0) target = $region5
  $region4: #{layernorm_lastdim.1} parent=0 // pred_region
    _
  $region5: #{layernorm_lastdim.1} parent=0 // pred_fallthru
    _
  // Predicated region
  $region6: #{layernorm_lastdim.1} parent=0 // pred_check
    _
  $region7: #{layernorm_lastdim.1} parent=0 // pred_check_branch
    %11 = sbr.rel (0) target = $region9
  $region8: #{layernorm_lastdim.1} parent=0 // pred_region
    _
  $region9: #{layernorm_lastdim.1} parent=0 // pred_fallthru
    _
  // Predicated region
  $region10: #{layernorm_lastdim.1} parent=0 // pred_check
    _
  $region11: #{layernorm_lastdim.1} parent=0 // pred_check_branch
    %13 = sbr.rel (0) target = $region13
  $region12: #{layernorm_lastdim.1} parent=0 // pred_region
    _
  $region13: #{layernorm_lastdim.1} parent=0 // pred_fallthru
    _
  %v14 = vld [vmem:[%s0] sm:$0x7]
  %vm15 = vcmask 321536
  %v16 = vsel %vm15, %v14, 0.0
  %v17 = vrot.slane %v16, 4
  %v18 = vadd.f32 %v16, %v17
  %v19 = vrot.slane %v18, 2
  %v20 = vadd.f32 %v18, %v19
  %v21 = vrot.slane %v20, 1
  %v22 = vadd.f32 %v20, %v21
  %v23 = vmul.f32 %v22, 0.33333334
  %v24 = vsub.f32 %v14, %v23
  %v25 = vmul.f32 %v24, %v24
  %v26 = vsel %vm15, %v25, 0.0
  %v27 = vrot.slane %v26, 4
  %v28 = vadd.f32 %v26, %v27
  %v29 = vrot.slane %v28, 2
  %v30 = vadd.f32 %v28, %v29
  %v31 = vrot.slane %v30, 1
  %v32 = vadd.f32 %v30, %v31
  %v33 = vmul.f32 %v32, 0.33333334
  %v34 = vadd.f32 %v33, 1e-05
  %v35 = vrsqrt.pop %v34
  %v36 = vld [vmem:[%s1] sm:$0x7]
  %v37 = vld [vmem:[%s2] sm:$0x7]
  %39 = vset.pattern.permute.xlu0 0
  %40 = vperm.xlu0 %39, %v36
  %v41 = vpop.permute.xlu0 %40
  %v43 = vmul.f32 %v35, %v41
  %v44 = vmul.f32 %v24, %v43
  %46 = vset.pattern.permute.xlu0 0
  %47 = vperm.xlu0 %46, %v37
  %v48 = vpop.permute.xlu0 %47
  %v50 = vadd.f32 %v44, %v48
  %51 = vst.msk [vmem:[%s3] sm:$0x7] %vm15, %v50
  // Predicated region
  $region14: #{layernorm_lastdim.1} parent=0 // pred_check
    _
  $region15: #{layernorm_lastdim.1} parent=0 // pred_check_branch
    %53 = sbr.rel (0) target = $region17
  $region16: #{layernorm_lastdim.1} parent=0 // pred_region
    _
  $region17: #{layernorm_lastdim.1} parent=0 // pred_fallthru
    _
  // Predicated region
  $region18: #{layernorm_lastdim.1} parent=0 // pred_check
    _
  $region19: #{layernorm_lastdim.1} parent=0 // pred_check_branch
    %55 = sbr.rel (0) target = $region21
  $region20: #{layernorm_lastdim.1} parent=0 // pred_region
    _
  $region21: #{layernorm_lastdim.1} parent=0 // pred_fallthru
    _

</llo_original>
